<compile_context>
chip_gen: v5e
topology: v5e:2x2
jax: 0.10.0
libtpu: 0.0.40
codegen_flags: <defaults>
</compile_context>

<pallas_src>
import functools

import jax
import jax.numpy as jnp
from jax.experimental import pallas as pl
from jax.experimental.pallas import tpu as pltpu


def _adaptive_norm_kernel(x_ref, ab_ref, o_ref):
    # x_ref : (tr, t_hw) tile of the flattened input
    # ab_ref: (tr, 2)    per-row [multiplier, additive] coefficients
    a = ab_ref[:, 0:1]                      # (tr, 1)
    b = ab_ref[:, 1:2]                      # (tr, 1)
    o_ref[...] = (a * x_ref[...] + b).astype(o_ref.dtype)


def _choose_tiles(rows, hw, *, target_bytes=2 << 20, min_grid=4):
    """Pick (tr, t_hw): exact divisors of (rows, hw), ~target_bytes per block,
    and at least `min_grid` grid steps when the minimum block size allows."""
    esize = 4  # float32

    # Lane-axis candidates: multiples of 128 dividing hw (largest first);
    # fall back to the full extent when hw is not lane-aligned.
    hw_cands = [d for d in range(hw, 0, -128) if d % 128 == 0 and hw % d == 0]
    hw_cands = hw_cands or [hw]
    # Row-axis candidates: multiples of 8 dividing rows (largest first);
    # fall back to the full extent when rows is not sublane-aligned.
    r_cands = [d for d in range(rows, 0, -8) if d % 8 == 0 and rows % d == 0]
    r_cands = r_cands or [rows]

    # Widest lane tile that can still fit the budget with the smallest row tile.
    t_hw = hw_cands[-1]
    for cand in hw_cands:
        if cand * r_cands[-1] * esize <= target_bytes:
            t_hw = cand
            break
    # Largest row tile under the budget for that lane tile.
    tr = r_cands[-1]
    for cand in r_cands:
        if cand * t_hw * esize <= target_bytes:
            tr = cand
            break

    # Ensure >= min_grid steps (DMA/compute overlap + v7x two-TC sharding),
    # shrinking row tiles first, then lane tiles, never below (8, 128)/full.
    ri, hi = r_cands.index(tr), hw_cands.index(t_hw)
    while pl.cdiv(rows, tr) * pl.cdiv(hw, t_hw) < min_grid:
        if ri + 1 < len(r_cands):
            ri += 1
            tr = r_cands[ri]
        elif hi + 1 < len(hw_cands):
            hi += 1
            t_hw = hw_cands[hi]
        else:
            break
    return tr, t_hw


def adaptive_norm(x, w0, w1, gamma, beta, running_mean, running_var, eps=1e-3):
    """x: (N, C, H, W) float32.  Returns w0*x + w1*BN_eval(x), shape (N,C,H,W)."""
    N, C, H, W = x.shape
    HW = H * W
    rows = N * C

    # ---- fold BN (eval) + w0/w1 into per-channel coefficients (tiny math) ----
    scale = gamma / jnp.sqrt(running_var + eps)            # (C,)
    bias = beta - running_mean * scale                      # (C,)
    a_row = jnp.tile(w0 + w1 * scale, N)                    # (N*C,)
    b_row = jnp.tile(w1 * bias, N)                          # (N*C,)
    ab = jnp.stack([a_row, b_row], axis=-1).astype(jnp.float32)  # (N*C, 2)

    # NCHW -> (N*C, H*W): pure reshape of contiguous data, no transpose/copy.
    x2d = x.reshape(rows, HW)

    tr, t_hw = _choose_tiles(rows, HW)
    n_r = rows // tr if rows % tr == 0 else pl.cdiv(rows, tr)
    n_h = HW // t_hw if HW % t_hw == 0 else pl.cdiv(HW, t_hw)

    # Explicit VMEM budget: double-buffered (x in + out) blocks plus the
    # lane-padded coefficient block, with headroom; kept well under v7x's
    # 64 MiB physical VMEM.
    blk_bytes = tr * t_hw * 4
    ab_blk_bytes = tr * 128 * 4
    vmem_bytes = 2 * (2 * blk_bytes + ab_blk_bytes) + (4 << 20)
    vmem_bytes = int(min(max(vmem_bytes, 16 << 20), 48 << 20))

    out2d = pl.pallas_call(
        _adaptive_norm_kernel,
        out_shape=jax.ShapeDtypeStruct((rows, HW), x.dtype),
        grid_spec=pltpu.PrefetchScalarGridSpec(
            num_scalar_prefetch=0,
            grid=(n_r, n_h),
            in_specs=[
                pl.BlockSpec((tr, t_hw), lambda i, j: (i, j)),  # x tile
                pl.BlockSpec((tr, 2), lambda i, j: (i, 0)),     # packed [a, b]
            ],
            out_specs=pl.BlockSpec((tr, t_hw), lambda i, j: (i, j)),
        ),
        compiler_params=pltpu.CompilerParams(
            dimension_semantics=("parallel", "parallel"),
            vmem_limit_bytes=vmem_bytes),
    )(x2d, ab)

    return out2d.reshape(N, C, H, W)


def _reference(x, w0, w1, gamma, beta, running_mean, running_var, *, eps=1e-3):
    """Plain-JAX mirror of w_0 * x + w_1 * BatchNorm2d(x) (eval mode)."""
    s = gamma / jnp.sqrt(running_var + eps)
    b = beta - running_mean * s
    bn = x * s[None, :, None, None] + b[None, :, None, None]
    return w0 * x + w1 * bn


if __name__ == "__main__":
    key = jax.random.PRNGKey(0)
    k_x, k_g, k_b, k_m, k_v = jax.random.split(key, 5)

    N, C, H, W = 2, 4, 16, 16
    x = jax.random.normal(k_x, (N, C, H, W), dtype=jnp.float32)

    # Non-trivial parameter values (module initializes w_0=1, w_1=0, but we
    # want the BN branch exercised numerically).
    w0 = jnp.float32(0.9)
    w1 = jnp.float32(0.35)
    gamma = 1.0 + 0.1 * jax.random.normal(k_g, (C,), dtype=jnp.float32)
    beta = 0.1 * jax.random.normal(k_b, (C,), dtype=jnp.float32)
    running_mean = 0.1 * jax.random.normal(k_m, (C,), dtype=jnp.float32)
    running_var = jnp.abs(1.0 + 0.1 * jax.random.normal(k_v, (C,),
                                                        dtype=jnp.float32))

    # jit so the coefficient folding, reshape and pallas_call fuse into one
    # dispatch (dominant cost at this tiny size is per-op overhead).
    fn = jax.jit(adaptive_norm)
    out = jax.block_until_ready(fn(x, w0, w1, gamma, beta,
                                   running_mean, running_var, 1e-3))

    ref = _reference(x, w0, w1, gamma, beta, running_mean, running_var,
                     eps=1e-3)
    assert out.shape == (N, C, H, W), out.shape
    assert jnp.allclose(out, ref, atol=1e-5, rtol=1e-5), (
        float(jnp.max(jnp.abs(out - ref))))
    print("KERNEL_OK")
</pallas_src>

<mosaic_0001>
module attributes {stable_mosaic.version = 11 : i64} {
  func.func @_adaptive_norm_kernel(%arg0: i32, %arg1: i32, %arg2: memref<8x128xf32, #tpu.memory_space<vmem>>, %arg3: memref<8x2xf32, #tpu.memory_space<vmem>>, %arg4: memref<8x128xf32, #tpu.memory_space<vmem>>) attributes {dimension_semantics = [#tpu.dimension_semantics<parallel>, #tpu.dimension_semantics<parallel>], iteration_bounds = array<i64: 1, 2>, scalar_prefetch = 0 : i64, scratch_operands = 0 : i64, tpu.core_type = #tpu.core_type<tc>, window_params = [{transform_indices = @transform_0, window_bounds = array<i64: 8, 128>}, {transform_indices = @transform_1, window_bounds = array<i64: 8, 2>}, {transform_indices = @transform_2, window_bounds = array<i64: 8, 128>}]} {
    %c0 = arith.constant 0 : index
    %c0_0 = arith.constant 0 : index
    %0 = vector.load %arg3[%c0, %c0_0] : memref<8x2xf32, #tpu.memory_space<vmem>>, vector<8x1xf32>
    %c0_1 = arith.constant 0 : index
    %c1 = arith.constant 1 : index
    %1 = vector.load %arg3[%c0_1, %c1] : memref<8x2xf32, #tpu.memory_space<vmem>>, vector<8x1xf32>
    %c0_2 = arith.constant 0 : index
    %c0_3 = arith.constant 0 : index
    %2 = vector.load %arg2[%c0_2, %c0_3] : memref<8x128xf32, #tpu.memory_space<vmem>>, vector<8x128xf32>
    %3 = vector.broadcast %0 : vector<8x1xf32> to vector<8x128xf32>
    %4 = arith.mulf %3, %2 : vector<8x128xf32>
    %5 = vector.broadcast %1 : vector<8x1xf32> to vector<8x128xf32>
    %6 = arith.addf %4, %5 : vector<8x128xf32>
    %c0_4 = arith.constant 0 : index
    %c0_5 = arith.constant 0 : index
    %7 = vector.load %arg4[%c0_4, %c0_5] : memref<8x128xf32, #tpu.memory_space<vmem>>, vector<8x128xf32>
    tpu.vector_store %arg4[%c0_4, %c0_5], %6 {strides = array<i32>} : memref<8x128xf32, #tpu.memory_space<vmem>>, vector<8x128xf32>,
    return
  }
  func.func @transform_0(%arg0: i32, %arg1: i32) -> (i32, i32) {
    %c0_i32 = arith.constant 0 : i32
    return %arg0, %arg1 : i32, i32
  }
  func.func @transform_1(%arg0: i32, %arg1: i32) -> (i32, i32) {
    %c0_i32 = arith.constant 0 : i32
    %c0_i32_0 = arith.constant 0 : i32
    return %arg0, %c0_i32 : i32, i32
  }
  func.func @transform_2(%arg0: i32, %arg1: i32) -> (i32, i32) {
    %c0_i32 = arith.constant 0 : i32
    return %arg0, %arg1 : i32, i32
  }
}

</mosaic_0001>

<llo_original>
// kernel: tile.18
$region0: #{tile.18}
  %s0 = inlined_call_operand.vmem [shape: f32[2,4], index: 0, kind: input, shape index: {}]
  %s1 = inlined_call_operand.vmem [shape: f32[8,1], index: 1, kind: output, shape index: {}]
  $region1: #{tile.18} parent=0
    #allocation0 [shape = 'u8[4096]{0}', space=vmem, size = 0x1000, scoped, tag = 'scoped mem for output reshape']
    #allocation1 [shape = 'u8[4096]{0}', space=vmem, size = 0x1000, scoped, tag = 'scoped mem for input reshape']
    %s3 = ssub.s32 4, 1
    %v4 = vld [vmem:[%s0] sm:%s3]
    %5 = vst [vmem:[#allocation1] sm:%s3] %v4
    %v6 = vld [vmem:[#allocation1] sm:$0x1]
    %vm7 = vcmask 31744
    %8 = vst.msk [vmem:[#allocation0] sm:$0x1] %vm7, %v6
    %s9 = scalar_lea.vmem [#allocation1], 1
    %v10 = vld [vmem:[%s9] sm:$0x1]
    %11 = vrot.lane.b32.xlu0 %v10, 4
    %v12 = vpop.permute.xlu0 %11
    %vm13 = vcmask 64544
    %14 = vst.msk [vmem:[#allocation0] sm:$0x1] %vm13, %v12
    %s16 = ssub.s32 2, 1
    %v17 = vld [vmem:[#allocation0] sm:%s16]
    %s19 = ssub.s32 2, 1
    %20 = vst [vmem:[%s1] sm:%s19] %v17

// kernel: tile.13
$region0: #{tile.13}
  #allocation0 [shape = 's32[1]{0}', space=sflag, size = 0x4, scoped, tag = 'scoped memory for tile.13']
  %s0 = inlined_call_operand.vmem [shape: f32[4], index: 0, kind: input, shape index: {}]
  %s1 = inlined_call_operand.vmem [shape: f32[2,4], index: 1, kind: output, shape index: {}]
  // Predicated region
  $region2: #{tile.13} parent=0 // pred_check
    _
  $region3: #{tile.13} parent=0 // pred_check_branch
    %3 = sbr.rel (0) target = $region5
  $region4: #{tile.13} parent=0 // pred_region
    _
  $region5: #{tile.13} parent=0 // pred_fallthru
    _
  %v4 = vld [vmem:[%s0] ss:$0 sm:$0xff]
  %5 = vst [vmem:[%s1] sm:$0x3] %v4

// kernel: adaptive_norm.1
$region0: #{adaptive_norm.1}
  #allocation0 [shape = 'u32[]', space=smem, size = 0x4, offset = 0x4, fixed_abs, tag = 'smem constant byte address 0x4 - core index']
  #allocation1 [shape = 'u32[72,128]{1,0:T(1,128)}', space=vmem, size = 0x9000, scoped, tag = 'internal scratch']
  %s0 = inlined_call_operand.vmem [shape: f32[8,256], index: 0, kind: input, shape index: {}]
  %s1 = inlined_call_operand.vmem [shape: f32[8,2], index: 1, kind: input, shape index: {}]
  %s2 = inlined_call_operand.vmem [shape: f32[8,256], index: 2, kind: output, shape index: {}]
  %s3 = sld [smem:[#allocation0]]
  $region41: #{adaptive_norm.1} parent=0
    _
  %s5 = ssub.s32 1, %s3
  %s6 = scalar_select 0, %s5, %s3
  loop: start=0, step=1, limit=4
  $region2: #{adaptive_norm.1} parent=0 // loop_pre_header
    _
  $region3: #{adaptive_norm.1} parent=0 // loop_header
    %s8 = sphi 0, %s12
    %p9 = scmp.ge.s32.totalorder %s8, 4
    %s15 = sphi 0, %s27
    %s16 = sphi 0, %s23
    %s17 = sphi 0, %s15
    %s18 = sphi 0, %s16
    %s19 = sphi 0, %s17
    %s20 = sphi 0, %s18
    %s32 = sphi 0, %s34
    %s35 = sphi 0, %s32
    %s36 = sphi 0, %s35
    %s52 = sphi 0, %s36
    %s58 = sphi 0, %s60
    %s61 = sphi 0, %s58
    %s62 = sphi 0, %s61
    %s78 = sphi 0, %s62
    %s86 = sphi 0, %s88
    %s89 = sphi 0, %s86
    %s90 = sphi 0, %s89
    %s106 = sphi 0, %s90
  $region4: #{adaptive_norm.1} parent=0 // loop_header_branch
    %11 = sbr.rel (%p9) target = $region8
  $region5: #{adaptive_norm.1} parent=0 // loop_body
    %s13 = ssub.s32 %s8, 1
    %s14 = ssub.s32 %s8, 2
    %s21 = sadd.s32 1, %s16
    %p22 = scmp.ge.s32.totalorder %s21, 2
    %s23 = scalar_select %p22, 0, %s21
    %s24 = sadd.s32 1, %s15
    %s25 = scalar_select %p22, %s24, %s15
    %p26 = scmp.ge.s32.totalorder %s25, 1
    %s27 = scalar_select %p26, 0, %s25
    %s28 = ssub.s32 %s15, %s27
    %s29 = ssub.s32 %s16, %s23
    %s30 = sor.u32 %s28, %s29
    %p31 = scmp.eq.s32.totalorder %s30, 0
    %s33 = sadd.s32 %s32, 1
    %s34 = scalar_select %p31, %s32, %s33
    %p37 = pneg %p31
    %p38 = scmp.eq.s32.totalorder %s8, 1
    %p39 = por %p37, %p38
    %p40 = scmp.ne.s32.totalorder %s32, %s35
    %p41 = scmp.eq.s32.totalorder %s8, 0
    %p42 = por %p40, %p41
    %p43 = scmp.ne.s32.totalorder %s32, %s35
    %p44 = scmp.eq.s32.totalorder %s13, 1
    %p45 = por %p43, %p44
    %p46 = scmp.ne.s32.totalorder %s35, %s36
    %p47 = scmp.eq.s32.totalorder %s13, 0
    %p48 = por %p46, %p47
    %p49 = scmp.ne.s32.totalorder %s35, %s36
    %p50 = scmp.eq.s32.totalorder %s14, 1
    %p51 = por %p49, %p50
    %p53 = scmp.ne.s32.totalorder %s36, %s52
    %p54 = scmp.eq.s32.totalorder %s14, 0
    %p55 = por %p53, %p54
    %s56 = ssub.s32 %s15, %s27
    %p57 = scmp.eq.s32.totalorder %s56, 0
    %s59 = sadd.s32 %s58, 1
    %s60 = scalar_select %p57, %s58, %s59
    %p63 = pneg %p57
    %p64 = scmp.eq.s32.totalorder %s8, 1
    %p65 = por %p63, %p64
    %p66 = scmp.ne.s32.totalorder %s58, %s61
    %p67 = scmp.eq.s32.totalorder %s8, 0
    %p68 = por %p66, %p67
    %p69 = scmp.ne.s32.totalorder %s58, %s61
    %p70 = scmp.eq.s32.totalorder %s13, 1
    %p71 = por %p69, %p70
    %p72 = scmp.ne.s32.totalorder %s61, %s62
    %p73 = scmp.eq.s32.totalorder %s13, 0
    %p74 = por %p72, %p73
    %p75 = scmp.ne.s32.totalorder %s61, %s62
    %p76 = scmp.eq.s32.totalorder %s14, 1
    %p77 = por %p75, %p76
    %p79 = scmp.ne.s32.totalorder %s62, %s78
    %p80 = scmp.eq.s32.totalorder %s14, 0
    %p81 = por %p79, %p80
    %s82 = ssub.s32 %s15, %s27
    %s83 = ssub.s32 %s16, %s23
    %s84 = sor.u32 %s82, %s83
    %p85 = scmp.eq.s32.totalorder %s84, 0
    %s87 = sadd.s32 %s86, 1
    %s88 = scalar_select %p85, %s86, %s87
    %p91 = pneg %p85
    %p92 = scmp.eq.s32.totalorder %s8, 1
    %p93 = por %p91, %p92
    %p94 = scmp.ne.s32.totalorder %s86, %s89
    %p95 = scmp.eq.s32.totalorder %s8, 0
    %p96 = por %p94, %p95
    %p97 = scmp.ne.s32.totalorder %s86, %s89
    %p98 = scmp.eq.s32.totalorder %s13, 1
    %p99 = por %p97, %p98
    %p100 = scmp.ne.s32.totalorder %s89, %s90
    %p101 = scmp.eq.s32.totalorder %s13, 0
    %p102 = por %p100, %p101
    %p103 = scmp.ne.s32.totalorder %s89, %s90
    %p104 = scmp.eq.s32.totalorder %s14, 1
    %p105 = por %p103, %p104
    %p107 = scmp.ne.s32.totalorder %s90, %s106
    %p108 = scmp.eq.s32.totalorder %s14, 0
    %p109 = por %p107, %p108
    %p110 = scmp.le.s32.totalorder 1, %s8
    %p111 = scmp.lt.s32.totalorder %s8, 3
    %p112 = pnand %p110, %p111
    %p113 = pneg %p112
    // Predicated region
    $region9: #{adaptive_norm.1} parent=5 // pred_check
      _
    $region10: #{adaptive_norm.1} parent=5 // pred_check_branch
      %115 = sbr.rel (%p112) target = $region12
    $region11: #{adaptive_norm.1} parent=5 // pred_region
      %s116 = ssub.s32 %s8, 1
      // Predicated region
      $region13: #{adaptive_norm.1} parent=11 // pred_check
        %p117 = pneg %p74
      $region14: #{adaptive_norm.1} parent=11 // pred_check_branch
        %119 = sbr.rel (%p117) target = $region16
      $region15: #{adaptive_norm.1} parent=11 // pred_region
        %p120 = scmp.lt.s32.totalorder %s17, 0
        %s121 = scalar_select %p120, %s17, 0
        %s122 = smul.addr %s121, 8
        %s123 = scalar_lea.vmem %s1, %s122
      $region16: #{adaptive_norm.1} parent=11 // pred_fallthru
        _
    $region12: #{adaptive_norm.1} parent=5 // pred_fallthru
      _
    %p124 = scmp.lt.s32.totalorder %s8, 2
    // Predicated region
    $region17: #{adaptive_norm.1} parent=5 // pred_check
      %p125 = pneg %p124
    $region18: #{adaptive_norm.1} parent=5 // pred_check_branch
      %127 = sbr.rel (%p125) target = $region20
    $region19: #{adaptive_norm.1} parent=5 // pred_region
      // Predicated region
      $region21: #{adaptive_norm.1} parent=19 // pred_check
        %p128 = pneg %p42
      $region22: #{adaptive_norm.1} parent=19 // pred_check_branch
        %130 = sbr.rel (%p128) target = $region24
      $region23: #{adaptive_norm.1} parent=19 // pred_region
        %p131 = scmp.lt.s32.totalorder %s15, 0
        %s132 = scalar_select %p131, %s15, 0
        %p133 = scmp.lt.s32.totalorder %s16, 1
        %s134 = scalar_select %p133, %s16, 1
        %s135 = smul.addr %s132, 2
        %s136 = sadd.s32 %s134, %s135
        %s137 = smul.addr %s136, 8
        %s138 = scalar_lea.vmem %s0, %s137
      $region24: #{adaptive_norm.1} parent=19 // pred_fallthru
        _
    $region20: #{adaptive_norm.1} parent=5 // pred_fallthru
      _
    %p139 = scmp.le.s32.totalorder 1, %s8
    %p140 = scmp.lt.s32.totalorder %s8, 3
    %p141 = pnand %p139, %p140
    %p142 = pneg %p141
    // Predicated region
    $region25: #{adaptive_norm.1} parent=5 // pred_check
      _
    $region26: #{adaptive_norm.1} parent=5 // pred_check_branch
      %144 = sbr.rel (%p141) target = $region28
    $region27: #{adaptive_norm.1} parent=5 // pred_region
      %s145 = ssub.s32 %s8, 1
      %p146 = scmp.lt.s32.totalorder %s17, 0
      %s147 = scalar_select %p146, %s17, 0
      %p148 = scmp.lt.s32.totalorder %s18, 1
      %s149 = scalar_select %p148, %s18, 1
      %s150 = smul.addr %s147, 2
      %s151 = sadd.s32 %s149, %s150
      %s152 = smul.addr %s151, 8
      %s153 = scalar_lea.vmem %s0, %s152
      %p154 = pneg %p48
      %p155 = pneg %p45
      %p156 = scmp.lt.s32.totalorder %s17, 0
      %s157 = scalar_select %p156, %s17, 0
      %s158 = smul.addr %s157, 8
      %s159 = scalar_lea.vmem %s1, %s158
      %p160 = pneg %p74
      %p161 = pneg %p71
      %p162 = pneg %p102
      %p163 = pneg %p99
      %p164 = scmp.lt.s32.totalorder %s17, 0
      %s165 = scalar_select %p164, %s17, 0
      %p166 = scmp.lt.s32.totalorder %s18, 1
      %s167 = scalar_select %p166, %s18, 1
      %s168 = smul.addr %s165, 2
      %s169 = sadd.s32 %s167, %s168
      %s170 = smul.addr %s169, 8
      %s171 = scalar_lea.vmem %s2, %s170
      %p172 = scmp.lt.s32.totalorder %s17, 0
      %s173 = scalar_select %p172, %s17, 0
      %p174 = scmp.lt.s32.totalorder %s18, 1
      %s175 = scalar_select %p174, %s18, 1
      %s176 = smul.addr %s173, 2
      %s177 = sadd.s32 %s175, %s176
      %s178 = smul.addr %s177, 8
      %s179 = scalar_lea.vmem %s0, %s178
      %p180 = scmp.lt.s32.totalorder %s17, 0
      %s181 = scalar_select %p180, %s17, 0
      %s182 = smul.addr %s181, 8
      %s183 = scalar_lea.vmem %s1, %s182
      %p184 = scmp.lt.s32.totalorder %s17, 0
      %s185 = scalar_select %p184, %s17, 0
      %p186 = scmp.lt.s32.totalorder %s18, 1
      %s187 = scalar_select %p186, %s18, 1
      %s188 = smul.addr %s185, 2
      %s189 = sadd.s32 %s187, %s188
      %s190 = smul.addr %s189, 8
      %s191 = scalar_lea.vmem %s2, %s190
      %v192 = vld [vmem:[%s183] sm:$0xff]
      %v193 = vld [vmem:[%s179] sm:$0xff]
      %195 = vset.pattern.permute.xlu0 0
      %196 = vperm.xlu0 %195, %v192
      %v197 = vpop.permute.xlu0 %196
      %v199 = vmul.f32 %v197, %v193
      %200 = vset.pattern.permute.xlu0 1
      %201 = vperm.xlu0 %200, %v192
      %v202 = vpop.permute.xlu0 %201
      %v204 = vadd.f32 %v199, %v202
      %205 = vst [vmem:[%s191] sm:$0xff] %v204
      %p206 = scmp.lt.s32.totalorder %s17, 0
      %s207 = scalar_select %p206, %s17, 0
      %p208 = scmp.lt.s32.totalorder %s18, 1
      %s209 = scalar_select %p208, %s18, 1
      %s210 = smul.addr %s207, 2
      %s211 = sadd.s32 %s209, %s210
      %s212 = smul.addr %s211, 8
      %s213 = scalar_lea.vmem %s2, %s212
      // Predicated region
      $region29: #{adaptive_norm.1} parent=27 // pred_check
        %p214 = pneg %p99
      $region30: #{adaptive_norm.1} parent=27 // pred_check_branch
        %216 = sbr.rel (%p214) target = $region32
      $region31: #{adaptive_norm.1} parent=27 // pred_region
        _
      $region32: #{adaptive_norm.1} parent=27 // pred_fallthru
        _
    $region28: #{adaptive_norm.1} parent=5 // pred_fallthru
      _
    %p217 = scmp.le.s32.totalorder 2, %s8
    // Predicated region
    $region33: #{adaptive_norm.1} parent=5 // pred_check
      %p218 = pneg %p217
    $region34: #{adaptive_norm.1} parent=5 // pred_check_branch
      %220 = sbr.rel (%p218) target = $region36
    $region35: #{adaptive_norm.1} parent=5 // pred_region
      %s221 = ssub.s32 %s8, 2
      // Predicated region
      $region37: #{adaptive_norm.1} parent=35 // pred_check
        %p222 = pneg %p105
      $region38: #{adaptive_norm.1} parent=35 // pred_check_branch
        %224 = sbr.rel (%p222) target = $region40
      $region39: #{adaptive_norm.1} parent=35 // pred_region
        %p225 = scmp.lt.s32.totalorder %s19, 0
        %s226 = scalar_select %p225, %s19, 0
        %p227 = scmp.lt.s32.totalorder %s20, 1
        %s228 = scalar_select %p227, %s20, 1
        %s229 = smul.addr %s226, 2
        %s230 = sadd.s32 %s228, %s229
        %s231 = smul.addr %s230, 8
        %s232 = scalar_lea.vmem %s2, %s231
      $region40: #{adaptive_norm.1} parent=35 // pred_fallthru
        _
    $region36: #{adaptive_norm.1} parent=5 // pred_fallthru
      _
  $region6: #{adaptive_norm.1} parent=0 // loop_footer
    %s12 = sadd.s32 1, %s8
  $region7: #{adaptive_norm.1} parent=0 // loop_footer_branch
    %7 = sbr.rel target = $region3
  $region8: #{adaptive_norm.1} parent=0 // loop_exit
    _

</llo_original>
